<compile_context>
chip_gen: v7x
topology: tpu7x:2x2x1
jax: 0.10.0
libtpu: 0.0.40
codegen_flags: <defaults>
</compile_context>

<pallas_src>
import functools

import jax
import jax.numpy as jnp
from jax.experimental import pallas as pl
from jax.experimental.pallas import tpu as pltpu


# ---------------------------------------------------------------------------
# Per-generation VMEM budgets
# ---------------------------------------------------------------------------
@functools.lru_cache(maxsize=1)
def _vmem_budgets():
    """Returns (vmem_limit_bytes, input_slab_budget_bytes).

    slab budget = total bytes for the double-buffered input block (2 buffers).
    """
    phys = 64 * 1024 * 1024                      # conservative default (v7x)
    try:
        info = pltpu.get_tpu_info()
        phys = int(getattr(info, "vmem_capacity_bytes", phys)) or phys
    except Exception:                            # query unavailable -> defaults
        pass
    if phys >= 96 * 1024 * 1024:                 # v5e / v6e: 128 MiB physical
        return 64 * 1024 * 1024, 32 * 1024 * 1024
    # v7x (64 MiB physical) or unknown: leave headroom for output + scratch.
    return 48 * 1024 * 1024, 24 * 1024 * 1024


def _cdiv(a, b):
    return -(-a // b)


def _round_up(x, m):
    return _cdiv(x, m) * m


def _max_identity(dtype):
    """Neutral fill value for max over padded reduction rows."""
    dtype = jnp.dtype(dtype)
    if jnp.issubdtype(dtype, jnp.floating):
        return float("-inf")
    if dtype == jnp.dtype(jnp.bool_):
        return False
    if jnp.issubdtype(dtype, jnp.integer):
        return int(jnp.iinfo(dtype).min)
    raise NotImplementedError(f"max_reduce: unsupported dtype {dtype}")


# ---------------------------------------------------------------------------
# Kernels (factories close over static R / TR / fill value)
# ---------------------------------------------------------------------------
def _make_mid_kernel(R, tr, fill_value):
    need_mask = (R % tr) != 0

    def kernel(x_ref, o_ref):
        """x_ref: (TB, TR, TN); o_ref: (TB, TN). Grid = (Bb, Nb, Rb)."""
        k = pl.program_id(2)
        x = x_ref[...]
        if need_mask:
            # Neutralize padded reduction rows of the (possibly) partial block.
            row = jax.lax.broadcasted_iota(jnp.int32, x.shape, 1)
            x = jnp.where(row + k * tr < R, x, jnp.asarray(fill_value, x.dtype))
        partial = jnp.max(x, axis=1)

        @pl.when(k == 0)
        def _():
            o_ref[...] = partial

        @pl.when(k != 0)
        def _():
            o_ref[...] = jnp.maximum(o_ref[...], partial)

    return kernel


def _make_last_kernel(R, tr, fill_value):
    need_mask = (R % tr) != 0

    def kernel(x_ref, o_ref):
        """x_ref: (TB, TR); o_ref: (TB, 1). Grid = (Bb, Rb)."""
        k = pl.program_id(1)
        x = x_ref[...]
        if need_mask:
            lane = jax.lax.broadcasted_iota(jnp.int32, x.shape, 1)
            x = jnp.where(lane + k * tr < R, x, jnp.asarray(fill_value, x.dtype))
        partial = jnp.max(x, axis=1, keepdims=True)

        @pl.when(k == 0)
        def _():
            o_ref[...] = partial

        @pl.when(k != 0)
        def _():
            o_ref[...] = jnp.maximum(o_ref[...], partial)

    return kernel


# ---------------------------------------------------------------------------
# Tile selection
# ---------------------------------------------------------------------------
def _choose_batch_tile(B, sub, cap):
    """Full B when tiny, else a power-of-two multiple of `sub` (<= cap)."""
    if B < sub:
        return B                                  # == full dim -> always legal
    tb = cap
    while tb > sub and tb > B:
        tb //= 2
    return tb


def _choose_tiles_mid(B, R, N, itemsize, slab_budget):
    """(TB, TR, TN) for the (B, R, N) -> (B, N) kernel.

    Order (per perf review): keep the lane tile wide and the batch tile at its
    cap, size the reduction tile TR to fill the double-buffered slab budget,
    and only shrink TB / TN if even a minimal TR does not fit.
    """
    sub = max(8, 32 // itemsize)                  # dtype-native sublane pack
    tn = N if N <= 1024 else 1024                 # multiple of 128 or full N
    tb = _choose_batch_tile(B, sub, cap=256)

    # Guarantee >= 2 blocks on the parallel (B, N) plane when possible so both
    # TensorCores of a dual-core part (v7x) stream; TR re-fills the budget
    # below, so this is essentially free on single-core parts.
    if _cdiv(B, tb) * _cdiv(N, tn) == 1:
        if N >= 256:
            tn = max(128, _round_up(N // 2, 128))
        elif B >= 2 * sub:
            tb = max(sub, _round_up(B // 2, sub))

    # Make room for at least `sub` reduction rows before sizing TR.
    while tb > sub and 2 * tb * sub * tn * itemsize > slab_budget:
        tb = max(sub, (tb // 2) // sub * sub)
    while tn > 128 and 2 * tb * sub * tn * itemsize > slab_budget:
        tn = max(128, _round_up(tn // 2, 128))

    # Reduction tile: largest multiple of `sub` rows that fits (full R if it
    # fits).  Non-divisible R is handled by in-kernel masking.
    tr_fit = (slab_budget // (2 * tb * tn * itemsize)) // sub * sub
    tr = min(R, max(sub, tr_fit))
    return tb, tr, tn


def _choose_tiles_last(B, R, itemsize, slab_budget):
    """(TB, TR) for the (B, R) -> (B, 1) last-axis kernel (R on lanes)."""
    sub = max(8, 32 // itemsize)
    tb = _choose_batch_tile(B, sub, cap=512)
    # >= 2 blocks on the parallel B axis when possible (dual-core v7x).
    if _cdiv(B, tb) == 1 and B >= 2 * sub:
        tb = max(sub, _round_up(B // 2, sub))

    if 2 * tb * R * itemsize <= slab_budget:
        tr = R                                    # whole reduction resident
    else:
        tr = max(128, (slab_budget // (2 * tb * itemsize)) // 128 * 128)
        while tb > sub and 2 * tb * tr * itemsize > slab_budget:
            tb = max(sub, (tb // 2) // sub * sub)
    return tb, tr


# ---------------------------------------------------------------------------
# pallas_call wrappers
# ---------------------------------------------------------------------------
def _max_reduce_mid(x3, B, R, N, slab_budget=None):
    vmem_limit, default_slab = _vmem_budgets()
    slab_budget = default_slab if slab_budget is None else slab_budget
    itemsize = jnp.dtype(x3.dtype).itemsize
    tb, tr, tn = _choose_tiles_mid(B, R, N, itemsize, slab_budget)
    grid = (_cdiv(B, tb), _cdiv(N, tn), _cdiv(R, tr))   # R last -> "arbitrary"
    kernel = _make_mid_kernel(R, tr, _max_identity(x3.dtype))
    return pl.pallas_call(
        kernel,
        out_shape=jax.ShapeDtypeStruct((B, N), x3.dtype),
        grid_spec=pltpu.PrefetchScalarGridSpec(
            num_scalar_prefetch=0,
            grid=grid,
            in_specs=[pl.BlockSpec((tb, tr, tn), lambda i, j, k: (i, k, j))],
            out_specs=pl.BlockSpec((tb, tn), lambda i, j, k: (i, j)),
        ),
        compiler_params=pltpu.CompilerParams(
            dimension_semantics=("parallel", "parallel", "arbitrary"),
            vmem_limit_bytes=vmem_limit,
        ),
    )(x3)


def _max_reduce_last(x2, B, R, slab_budget=None):
    vmem_limit, default_slab = _vmem_budgets()
    slab_budget = default_slab if slab_budget is None else slab_budget
    itemsize = jnp.dtype(x2.dtype).itemsize
    tb, tr = _choose_tiles_last(B, R, itemsize, slab_budget)
    grid = (_cdiv(B, tb), _cdiv(R, tr))
    kernel = _make_last_kernel(R, tr, _max_identity(x2.dtype))
    return pl.pallas_call(
        kernel,
        out_shape=jax.ShapeDtypeStruct((B, 1), x2.dtype),
        grid_spec=pltpu.PrefetchScalarGridSpec(
            num_scalar_prefetch=0,
            grid=grid,
            in_specs=[pl.BlockSpec((tb, tr), lambda i, k: (i, k))],
            out_specs=pl.BlockSpec((tb, 1), lambda i, k: (i, 0)),
        ),
        compiler_params=pltpu.CompilerParams(
            dimension_semantics=("parallel", "arbitrary"),
            vmem_limit_bytes=vmem_limit,
        ),
    )(x2)


def max_reduce(x: jax.Array, d: int, *,
               min_elements_for_kernel: int = 16384,
               _slab_budget_bytes: int | None = None) -> jax.Array:
    """Equivalent of torch.Tensor.max(dim=d)[0] (values only)."""
    ndim = x.ndim
    d = d % ndim                                  # normalize negative axes
    shape = x.shape
    out_shape = shape[:d] + shape[d + 1:]

    # Tiny inputs: pallas_call fixed overhead dwarfs the actual work.
    if x.size <= min_elements_for_kernel:
        return jnp.max(x, axis=d)

    B = 1
    for s in shape[:d]:
        B *= s
    R = shape[d]
    N = 1
    for s in shape[d + 1:]:
        N *= s

    if N == 1:
        # Reducing the last axis: keep R on lanes (lane-dense loads).
        out = _max_reduce_last(x.reshape(B, R), B, R, _slab_budget_bytes)
    else:
        out = _max_reduce_mid(x.reshape(B, R, N), B, R, N, _slab_budget_bytes)
    return out.reshape(out_shape)


# ---------------------------------------------------------------------------
# Tests
# ---------------------------------------------------------------------------
if __name__ == "__main__":
    key = jax.random.PRNGKey(0)

    # Primary (spec-consistent) case: NCHW-like input, reduce over channels.
    x = jax.random.normal(key, (2, 4, 16, 16), dtype=jnp.float32)
    d = 1

    # Force the Pallas kernel path even though this test input is tiny.
    out = jax.block_until_ready(max_reduce(x, d, min_elements_for_kernel=0))
    ref = jnp.max(x, axis=d)
    assert out.shape == ref.shape, (out.shape, ref.shape)
    assert out.dtype == ref.dtype, (out.dtype, ref.dtype)
    assert jnp.array_equal(out, ref), "mismatch vs jnp.max reference"

    # Default call on the tiny input takes the jnp.max short-circuit.
    out_sc = jax.block_until_ready(max_reduce(x, d))
    assert jnp.array_equal(out_sc, ref)

    # Kernel-path checks: multi-block B, padded B block, d=0 (bf16),
    # last-axis reduction (N == 1 path, int32).
    extra = [
        ((16, 32, 8, 128), 2, jnp.float32),   # B=512 -> two B blocks
        ((10, 4, 16, 16), 1, jnp.float32),    # B=10  -> padded second B block
        ((4, 6, 256), 0, jnp.bfloat16),       # d=0 (B=1), bf16, sub=16
        ((8, 16, 64), 2, jnp.int32),          # reduce over last axis (N == 1)
    ]
    for i, (shp, dd, dt) in enumerate(extra):
        k = jax.random.PRNGKey(i + 1)
        if jnp.issubdtype(dt, jnp.integer):
            xi = jax.random.randint(k, shp, -1000, 1000, dtype=dt)
        else:
            xi = jax.random.normal(k, shp, dtype=dt)
        oi = jax.block_until_ready(max_reduce(xi, dd, min_elements_for_kernel=0))
        ri = jnp.max(xi, axis=dd)
        assert oi.shape == ri.shape and oi.dtype == ri.dtype, (shp, dd, dt)
        assert jnp.array_equal(oi, ri), (shp, dd, dt)

    # Masked non-divisible-R paths (forced with a tiny slab budget).
    xm = jax.random.normal(jax.random.PRNGKey(10), (16, 100, 256), jnp.float32)
    om = jax.block_until_ready(
        max_reduce(xm, 1, min_elements_for_kernel=0, _slab_budget_bytes=64 * 1024))
    assert jnp.array_equal(om, jnp.max(xm, axis=1)), "masked mid-axis path"

    xl = jax.random.normal(jax.random.PRNGKey(11), (16, 300), jnp.float32)
    ol = jax.block_until_ready(
        max_reduce(xl, 1, min_elements_for_kernel=0, _slab_budget_bytes=8 * 1024))
    assert jnp.array_equal(ol, jnp.max(xl, axis=1)), "masked last-axis path"

    print("KERNEL_OK")
</pallas_src>

<mosaic_0001>
module attributes {stable_mosaic.version = 11 : i64} {
  func.func @kernel(%arg0: i32, %arg1: i32, %arg2: i32, %arg3: memref<2x4x128xf32, #tpu.memory_space<vmem>>, %arg4: memref<2x128xf32, #tpu.memory_space<vmem>>) attributes {dimension_semantics = [#tpu.dimension_semantics<parallel>, #tpu.dimension_semantics<parallel>, #tpu.dimension_semantics<arbitrary>], iteration_bounds = array<i64: 1, 2, 1>, scalar_prefetch = 0 : i64, scratch_operands = 0 : i64, tpu.core_type = #tpu.core_type<tc>, window_params = [{transform_indices = @transform_0, window_bounds = array<i64: 2, 4, 128>}, {transform_indices = @transform_1, window_bounds = array<i64: 2, 128>}]} {
    %c0 = arith.constant 0 : index
    %c0_0 = arith.constant 0 : index
    %c0_1 = arith.constant 0 : index
    %0 = vector.load %arg3[%c0, %c0_0, %c0_1] : memref<2x4x128xf32, #tpu.memory_space<vmem>>, vector<2x4x128xf32>
    %cst = arith.constant dense<0xFF800000> : vector<2x128xf32>
    %1 = vector.multi_reduction <maximumf>, %0, %cst [1] : vector<2x4x128xf32> to vector<2x128xf32>
    %c0_i32 = arith.constant 0 : i32
    %2 = arith.cmpi eq, %arg2, %c0_i32 : i32
    %3 = arith.extui %2 : i1 to i32
    %c0_i32_2 = arith.constant 0 : i32
    %4 = arith.cmpi ne, %3, %c0_i32_2 : i32
    scf.if %4 {
      %c0_5 = arith.constant 0 : index
      %c0_6 = arith.constant 0 : index
      %8 = vector.load %arg4[%c0_5, %c0_6] : memref<2x128xf32, #tpu.memory_space<vmem>>, vector<2x128xf32>
      tpu.vector_store %arg4[%c0_5, %c0_6], %1 {strides = array<i32>} : memref<2x128xf32, #tpu.memory_space<vmem>>, vector<2x128xf32>,
    } else {
    }
    %c0_i32_3 = arith.constant 0 : i32
    %5 = arith.cmpi ne, %arg2, %c0_i32_3 : i32
    %6 = arith.extui %5 : i1 to i32
    %c0_i32_4 = arith.constant 0 : i32
    %7 = arith.cmpi ne, %6, %c0_i32_4 : i32
    scf.if %7 {
      %c0_5 = arith.constant 0 : index
      %c0_6 = arith.constant 0 : index
      %8 = vector.load %arg4[%c0_5, %c0_6] : memref<2x128xf32, #tpu.memory_space<vmem>>, vector<2x128xf32>
      %9 = arith.maximumf %8, %1 : vector<2x128xf32>
      %c0_7 = arith.constant 0 : index
      %c0_8 = arith.constant 0 : index
      %10 = vector.load %arg4[%c0_7, %c0_8] : memref<2x128xf32, #tpu.memory_space<vmem>>, vector<2x128xf32>
      tpu.vector_store %arg4[%c0_7, %c0_8], %9 {strides = array<i32>} : memref<2x128xf32, #tpu.memory_space<vmem>>, vector<2x128xf32>,
    } else {
    }
    return
  }
  func.func @transform_0(%arg0: i32, %arg1: i32, %arg2: i32) -> (i32, i32, i32) {
    %c0_i32 = arith.constant 0 : i32
    return %arg0, %arg2, %arg1 : i32, i32, i32
  }
  func.func @transform_1(%arg0: i32, %arg1: i32, %arg2: i32) -> (i32, i32) {
    %c0_i32 = arith.constant 0 : i32
    return %arg0, %arg1 : i32, i32
  }
}

</mosaic_0001>

<llo_original>
// kernel: tpu_custom_call.1
$region0: #{tpu_custom_call.1}
  #allocation0 [shape = 'u32[]', space=smem, size = 0x4, offset = 0x4, fixed_abs, tag = 'smem constant byte address 0x4 - core index']
  #allocation1 [shape = 'u32[144,128]{1,0:T(1,128)}', space=vmem, size = 0x12000, scoped, tag = 'internal scratch']
  %s0 = inlined_call_operand.hbm [shape: f32[2,4,256], index: 0, kind: input, shape index: {}]
  %s1 = inlined_call_operand.hbm [shape: f32[2,256], index: 1, kind: output, shape index: {}]
  %s2 = sld [smem:[#allocation0]]
  $region49: #{tpu_custom_call.1} parent=0
    _
  %s4 = ssub.s32 1, %s2
  %s5 = scalar_select 0, %s4, %s2
  $region1: #{tpu_custom_call.1} parent=0
    #allocation2 [shape = 'u8[8192]{0}', space=vmem, size = 0x2000, scoped, tag = 'input window, operand 0']
    #allocation3 [shape = 's32[2]{0}', space=sflag, size = 0x8, scoped, tag = 'scoped memory for tpu_custom_call.1']
    #allocation4 [shape = 's32[2]{0}', space=sflag, size = 0x8, scoped, tag = 'scoped memory for tpu_custom_call.1']
    #allocation5 [shape = 'u8[2048]{0}', space=vmem, size = 0x800, scoped, tag = 'output window, operand 0']
    %6 = vsyncpa [#allocation3], 0
    %s7 = scalar_lea.sflag [#allocation3], 1
    %8 = vsyncpa %s7, 0
    %9 = vsyncpa [#allocation4], 0
    %s10 = scalar_lea.sflag [#allocation4], 1
    %11 = vsyncpa %s10, 0
    loop: start=0, step=1, limit=4
    $region2: #{tpu_custom_call.1} parent=1 // loop_pre_header
      _
    $region3: #{tpu_custom_call.1} parent=1 // loop_header
      %s13 = sphi 0, %s17
      %p14 = scmp.ge.s32.totalorder %s13, 4
      %s20 = sphi 0, %s39
      %s21 = sphi 0, %s35
      %s22 = sphi 0, %s31
      %s23 = sphi 0, %s20
      %s24 = sphi 0, %s21
      %s25 = sphi 0, %s22
      %s26 = sphi 0, %s23
      %s27 = sphi 0, %s24
      %s28 = sphi 0, %s25
      %s46 = sphi 0, %s48
      %s49 = sphi 0, %s46
      %s50 = sphi 0, %s49
      %s66 = sphi 0, %s50
      %s74 = sphi 0, %s76
      %s77 = sphi 0, %s74
      %s78 = sphi 0, %s77
      %s94 = sphi 0, %s78
    $region4: #{tpu_custom_call.1} parent=1 // loop_header_branch
      %16 = sbr.rel (%p14) target = $region8
    $region5: #{tpu_custom_call.1} parent=1 // loop_body
      %s18 = ssub.s32 %s13, 1
      %s19 = ssub.s32 %s13, 2
      %s29 = sadd.s32 1, %s22
      %p30 = scmp.ge.s32.totalorder %s29, 1
      %s31 = scalar_select %p30, 0, %s29
      %s32 = sadd.s32 1, %s21
      %s33 = scalar_select %p30, %s32, %s21
      %p34 = scmp.ge.s32.totalorder %s33, 2
      %s35 = scalar_select %p34, 0, %s33
      %s36 = sadd.s32 1, %s20
      %s37 = scalar_select %p34, %s36, %s20
      %p38 = scmp.ge.s32.totalorder %s37, 1
      %s39 = scalar_select %p38, 0, %s37
      %s40 = ssub.s32 %s20, %s39
      %s41 = ssub.s32 %s22, %s31
      %s42 = sor.u32 %s40, %s41
      %s43 = ssub.s32 %s21, %s35
      %s44 = sor.u32 %s42, %s43
      %p45 = scmp.eq.s32.totalorder %s44, 0
      %s47 = sadd.s32 %s46, 1
      %s48 = scalar_select %p45, %s46, %s47
      %p51 = pneg %p45
      %p52 = scmp.eq.s32.totalorder %s13, 1
      %p53 = por %p51, %p52
      %p54 = scmp.ne.s32.totalorder %s46, %s49
      %p55 = scmp.eq.s32.totalorder %s13, 0
      %p56 = por %p54, %p55
      %p57 = scmp.ne.s32.totalorder %s46, %s49
      %p58 = scmp.eq.s32.totalorder %s18, 1
      %p59 = por %p57, %p58
      %p60 = scmp.ne.s32.totalorder %s49, %s50
      %p61 = scmp.eq.s32.totalorder %s18, 0
      %p62 = por %p60, %p61
      %p63 = scmp.ne.s32.totalorder %s49, %s50
      %p64 = scmp.eq.s32.totalorder %s19, 1
      %p65 = por %p63, %p64
      %p67 = scmp.ne.s32.totalorder %s50, %s66
      %p68 = scmp.eq.s32.totalorder %s19, 0
      %p69 = por %p67, %p68
      %s70 = ssub.s32 %s20, %s39
      %s71 = ssub.s32 %s21, %s35
      %s72 = sor.u32 %s70, %s71
      %p73 = scmp.eq.s32.totalorder %s72, 0
      %s75 = sadd.s32 %s74, 1
      %s76 = scalar_select %p73, %s74, %s75
      %p79 = pneg %p73
      %p80 = scmp.eq.s32.totalorder %s13, 1
      %p81 = por %p79, %p80
      %p82 = scmp.ne.s32.totalorder %s74, %s77
      %p83 = scmp.eq.s32.totalorder %s13, 0
      %p84 = por %p82, %p83
      %p85 = scmp.ne.s32.totalorder %s74, %s77
      %p86 = scmp.eq.s32.totalorder %s18, 1
      %p87 = por %p85, %p86
      %p88 = scmp.ne.s32.totalorder %s77, %s78
      %p89 = scmp.eq.s32.totalorder %s18, 0
      %p90 = por %p88, %p89
      %p91 = scmp.ne.s32.totalorder %s77, %s78
      %p92 = scmp.eq.s32.totalorder %s19, 1
      %p93 = por %p91, %p92
      %p95 = scmp.ne.s32.totalorder %s78, %s94
      %p96 = scmp.eq.s32.totalorder %s19, 0
      %p97 = por %p95, %p96
      %p98 = scmp.le.s32.totalorder 1, %s13
      %p99 = scmp.lt.s32.totalorder %s13, 3
      %p100 = pnand %p98, %p99
      %p101 = pneg %p100
      // Predicated region
      $region9: #{tpu_custom_call.1} parent=5 // pred_check
        _
      $region10: #{tpu_custom_call.1} parent=5 // pred_check_branch
        %103 = sbr.rel (%p100) target = $region12
      $region11: #{tpu_custom_call.1} parent=5 // pred_region
        %s104 = ssub.s32 %s13, 1
      $region12: #{tpu_custom_call.1} parent=5 // pred_fallthru
        _
      %p105 = scmp.lt.s32.totalorder %s13, 2
      // Predicated region
      $region13: #{tpu_custom_call.1} parent=5 // pred_check
        %p106 = pneg %p105
      $region14: #{tpu_custom_call.1} parent=5 // pred_check_branch
        %108 = sbr.rel (%p106) target = $region16
      $region15: #{tpu_custom_call.1} parent=5 // pred_region
        // Predicated region
        $region17: #{tpu_custom_call.1} parent=15 // pred_check
          %p109 = pneg %p56
        $region18: #{tpu_custom_call.1} parent=15 // pred_check_branch
          %111 = sbr.rel (%p109) target = $region20
        $region19: #{tpu_custom_call.1} parent=15 // pred_region
          %s112 = sand.u32 %s46, 1
          %s113 = scalar_lea.sflag [#allocation3], %s112
          %s114 = sand.u32 %s46, 1
          %s115 = smul.addr %s114, 8
          %s116 = scalar_lea.vmem [#allocation2], %s115
          %s117 = smul.u32 2, %s20
          %s119 = ssub.s32 128, 128
          %120 = vsyncadd %s113, %s119
          %s121 = smul.addr %s22, 2
          %s122 = sadd.s32 %s21, %s121
          %s123 = smul.addr %s117, 2
          %s124 = sadd.s32 %s122, %s123
          %s125 = smul.addr %s124, 64
          %s126 = scalar_lea.hbm %s0, %s125
          %s127 = sshll.u32 %s116, 4
          %s128 = int_to_ptr.vmem [resolvable:$true] %s127
          %133 = dma.hbm_to_vmem [thread:$0]  %s126, 128, %s128, %s113, 128, 64, 4
        $region20: #{tpu_custom_call.1} parent=15 // pred_fallthru
          _
      $region16: #{tpu_custom_call.1} parent=5 // pred_fallthru
        _
      %p134 = scmp.le.s32.totalorder 1, %s13
      %p135 = scmp.lt.s32.totalorder %s13, 3
      %p136 = pnand %p134, %p135
      %p137 = pneg %p136
      // Predicated region
      $region21: #{tpu_custom_call.1} parent=5 // pred_check
        _
      $region22: #{tpu_custom_call.1} parent=5 // pred_check_branch
        %139 = sbr.rel (%p136) target = $region24
      $region23: #{tpu_custom_call.1} parent=5 // pred_region
        %s140 = ssub.s32 %s13, 1
        %s141 = sand.u32 %s49, 1
        %s142 = scalar_lea.sflag [#allocation3], %s141
        %s143 = sand.u32 %s49, 1
        %s144 = smul.addr %s143, 8
        %s145 = scalar_lea.vmem [#allocation2], %s144
        // Predicated region
        $region25: #{tpu_custom_call.1} parent=23 // pred_check
          %p146 = pneg %p62
        $region26: #{tpu_custom_call.1} parent=23 // pred_check_branch
          %148 = sbr.rel (%p146) target = $region28
        $region27: #{tpu_custom_call.1} parent=23 // pred_region
          %149 = dma.done %s142, 128
        $region28: #{tpu_custom_call.1} parent=23 // pred_fallthru
          _
        %s150 = sand.u32 %s49, 1
        %s151 = scalar_lea.sflag [#allocation3], %s150
        %s152 = sand.u32 %s49, 1
        %s153 = smul.addr %s152, 8
        %s154 = scalar_lea.vmem [#allocation2], %s153
        %p155 = pneg %p62
        %p156 = pneg %p59
        %p157 = pneg %p90
        %p158 = pneg %p87
        %s159 = sand.u32 %s77, 1
        %s160 = scalar_lea.sflag [#allocation4], %s159
        %s161 = sand.u32 %s77, 1
        %s162 = smul.addr %s161, 2
        %s163 = scalar_lea.vmem [#allocation5], %s162
        %s164 = smul.u32 2, %s23
        %v165 = vld [vmem:[%s145] sm:$0xf]
        %v166 = vld [vmem:[%s145 + $0x4] sm:$0xf]
        %vm167 = vcmask 1043456
        %v168 = vsel %vm167, %v165, -inf
        %v169 = vrot.slane %v168, 4
        %v170 = vmax.f32 %v168, %v169
        %v171 = vrot.slane %v170, 2
        %v172 = vmax.f32 %v170, %v171
        %v173 = vrot.slane %v172, 1
        %v174 = vmax.f32 %v172, %v173
        %v175 = vsel %vm167, %v166, -inf
        %v176 = vrot.slane %v175, 4
        %v177 = vmax.f32 %v175, %v176
        %v178 = vrot.slane %v177, 2
        %v179 = vmax.f32 %v177, %v178
        %v180 = vrot.slane %v179, 1
        %v181 = vmax.f32 %v179, %v180
        %p182 = scmp.eq.s32.totalorder %s25, 0
        // Predicated region
        $region29: #{tpu_custom_call.1} parent=23 // pred_check
          %p183 = pneg %p182
        $region30: #{tpu_custom_call.1} parent=23 // pred_check_branch
          %185 = sbr.rel (%p183) target = $region32
        $region31: #{tpu_custom_call.1} parent=23 // pred_region
          %vm188 = vcmask 1041409
          %v189 = vsel %vm188, %v181, %v174
          %191 = vst [vmem:[%s163] sm:$0x3] %v189
        $region32: #{tpu_custom_call.1} parent=23 // pred_fallthru
          _
        %p192 = scmp.ne.s32.totalorder %s25, 0
        // Predicated region
        $region33: #{tpu_custom_call.1} parent=23 // pred_check
          %p193 = pneg %p192
        $region34: #{tpu_custom_call.1} parent=23 // pred_check_branch
          %195 = sbr.rel (%p193) target = $region36
        $region35: #{tpu_custom_call.1} parent=23 // pred_region
          %v196 = vld [vmem:[%s163] sm:$0x3]
          %vm199 = vcmask 1041409
          %v200 = vsel %vm199, %v181, %v174
          %v202 = vmax.f32 %v196, %v200
          %203 = vst [vmem:[%s163] sm:$0x3] %v202
        $region36: #{tpu_custom_call.1} parent=23 // pred_fallthru
          _
        %s204 = sand.u32 %s77, 1
        %s205 = scalar_lea.sflag [#allocation4], %s204
        %s206 = sand.u32 %s77, 1
        %s207 = smul.addr %s206, 2
        %s208 = scalar_lea.vmem [#allocation5], %s207
        // Predicated region
        $region37: #{tpu_custom_call.1} parent=23 // pred_check
          %p209 = pneg %p87
        $region38: #{tpu_custom_call.1} parent=23 // pred_check_branch
          %211 = sbr.rel (%p209) target = $region40
        $region39: #{tpu_custom_call.1} parent=23 // pred_region
          %s213 = ssub.s32 32, 32
          %214 = vsyncadd %s205, %s213
          %s215 = smul.addr %s23, 2
          %s216 = sadd.s32 %s24, %s215
          %s217 = smul.addr %s216, 32
          %s218 = scalar_lea.hbm %s1, %s217
          %s220 = sshll.u32 %s208, 4
          %s221 = int_to_ptr.vmem [resolvable:$true] %s220
          %223 = dma.vmem_to_hbm [thread:$0]  %s221, 32, %s218, %s205
        $region40: #{tpu_custom_call.1} parent=23 // pred_fallthru
          _
      $region24: #{tpu_custom_call.1} parent=5 // pred_fallthru
        _
      %p224 = scmp.le.s32.totalorder 2, %s13
      // Predicated region
      $region41: #{tpu_custom_call.1} parent=5 // pred_check
        %p225 = pneg %p224
      $region42: #{tpu_custom_call.1} parent=5 // pred_check_branch
        %227 = sbr.rel (%p225) target = $region44
      $region43: #{tpu_custom_call.1} parent=5 // pred_region
        %s228 = ssub.s32 %s13, 2
        // Predicated region
        $region45: #{tpu_custom_call.1} parent=43 // pred_check
          %p229 = pneg %p93
        $region46: #{tpu_custom_call.1} parent=43 // pred_check_branch
          %231 = sbr.rel (%p229) target = $region48
        $region47: #{tpu_custom_call.1} parent=43 // pred_region
          %s232 = sand.u32 %s78, 1
          %s233 = scalar_lea.sflag [#allocation4], %s232
          %s234 = sand.u32 %s78, 1
          %s235 = smul.addr %s234, 2
          %s236 = scalar_lea.vmem [#allocation5], %s235
          %237 = dma.done %s233, 32
        $region48: #{tpu_custom_call.1} parent=43 // pred_fallthru
          _
      $region44: #{tpu_custom_call.1} parent=5 // pred_fallthru
        _
    $region6: #{tpu_custom_call.1} parent=1 // loop_footer
      %s17 = sadd.s32 1, %s13
    $region7: #{tpu_custom_call.1} parent=1 // loop_footer_branch
      %12 = sbr.rel target = $region3
    $region8: #{tpu_custom_call.1} parent=1 // loop_exit
      _
    %238 = vsyncpa [#allocation3], 1
    %s239 = scalar_lea.sflag [#allocation3], 1
    %240 = vsyncpa %s239, 1
    %241 = vsyncpa [#allocation4], 1
    %s242 = scalar_lea.sflag [#allocation4], 1
    %243 = vsyncpa %s242, 1

</llo_original>
